<compile_context>
chip_gen: v7x
topology: tpu7x:2x2x1
jax: 0.10.0
libtpu: 0.0.40
codegen_flags: <defaults>
</compile_context>

<pallas_src>
import jax
import jax.numpy as jnp
import numpy as np
from jax.experimental import pallas as pl
from jax.experimental.pallas import tpu as pltpu


# ------------------------------ helpers ------------------------------------

def _round_up(v, m):
    return (v + m - 1) // m * m


def _pick_lane_tile(hw, cin, c_cols, *, max_tile=4096, vmem_budget=12 << 20):
    """Spatial (lane) tile: large enough to amortize per-grid-step overhead,
    small enough that double-buffered in+out blocks fit the default scoped
    VMEM on every TPU generation, preferring tiles that divide the
    128-rounded extent so no padded pixels are moved."""
    hw128 = _round_up(hw, 128)
    per_px = 2 * (cin * 4 + c_cols * 2)        # 2x-buffered f32 in + bf16 out
    cap = max(128, min(max_tile, (vmem_budget // per_px) // 128 * 128))
    if hw128 <= cap:
        return hw128
    for t in range(cap, 127, -128):            # prefer zero-padding tiles
        if hw128 % t == 0:
            return t
    return cap


# ------------------------------ Pallas kernel -------------------------------

def _make_deconv_bn_relu_kernel(cin, use_mxu):
    def kernel(x_ref, w_ref, shift_ref, o_ref):
        # x_ref     : (Cin, T)          f32   input pixels, spatial in lanes
        # w_ref     : MXU: (Ccols, Cin) f32   BN-scale-folded weight, rows=(co,kh,kw)
        #             VPU: (Cin, Ccols, 1) f32
        # shift_ref : (Ccols, 1)        f32   BN shift per output row
        # o_ref     : (Ccols, T)        bf16  taps x pixels, lane-dense stores
        if use_mxu:
            acc = jnp.dot(w_ref[...].astype(jnp.bfloat16),
                          x_ref[...].astype(jnp.bfloat16),
                          preferred_element_type=jnp.float32)
        else:
            # Tiny Cin: unrolled f32 outer-product accumulation on the VPU.
            x = x_ref[...]                                  # (Cin, T)
            acc = w_ref[0] * x[0:1, :]                      # (Ccols,1)*(1,T)
            for ci in range(1, cin):
                acc = acc + w_ref[ci] * x[ci:ci + 1, :]
        o_ref[...] = jnp.maximum(acc + shift_ref[...], 0.0).astype(o_ref.dtype)
    return kernel


# ------------------------------ JAX wrapper ---------------------------------

def trans_basic_conv2d_forward(x_nchw, params, *, kernel_size=2, stride=2,
                               padding=0, dilation=1, eps=1e-5,
                               out_dtype=jnp.bfloat16):
    """Fused ConvTranspose2d(k=s, p=0, bias=False) + BatchNorm2d(eval) + ReLU."""
    if not (kernel_size == stride and padding == 0 and dilation == 1):
        raise NotImplementedError(
            "Only kernel_size == stride, padding=0, dilation=1, bias=False "
            "(the TransBasicConv2d defaults) are supported.")

    wt = params["deconv_w"]                     # (Cin, Cout, kH, kW) PyTorch layout
    cin, cout, kh, kw = wt.shape
    assert kh == kernel_size and kw == kernel_size, "weight/config mismatch"
    n, cin_x, h, w = x_nchw.shape
    assert cin_x == cin, "input channel mismatch"

    # Eval-mode BatchNorm folded into affine scale/shift.
    scale = params["bn_gamma"] / jnp.sqrt(params["bn_var"] + eps)       # (Cout,)
    shift = params["bn_beta"] - params["bn_mean"] * scale               # (Cout,)

    # Weight -> (Ccols, Cin), row order (co, kh, kw), BN scale folded in.
    c_cols = cout * kh * kw
    w_t = jnp.transpose(wt * scale[None, :, None, None], (1, 2, 3, 0))
    w_t = w_t.reshape(c_cols, cin).astype(jnp.float32)
    shift_cols = jnp.repeat(shift, kh * kw).reshape(c_cols, 1).astype(jnp.float32)

    # Input stays in NCHW: flatten spatial dims (free reshape), pad lanes only
    # if the chosen tile requires it.
    hw = h * w
    lane_tile = _pick_lane_tile(hw, cin, c_cols)
    hw_pad = _round_up(hw, lane_tile)
    x_flat = x_nchw.reshape(n, cin, hw).astype(jnp.float32)
    if hw_pad != hw:
        x_flat = jnp.pad(x_flat, ((0, 0), (0, 0), (0, hw_pad - hw)))

    use_mxu = cin >= 16
    if use_mxu:
        w_arg = w_t                                           # (Ccols, Cin)
        w_spec = pl.BlockSpec((c_cols, cin), lambda b, r: (0, 0))
    else:
        w_arg = jnp.transpose(w_t)[:, :, None]                # (Cin, Ccols, 1)
        w_spec = pl.BlockSpec((cin, c_cols, 1), lambda b, r: (0, 0, 0))

    kernel = _make_deconv_bn_relu_kernel(cin, use_mxu)
    grid = (n, hw_pad // lane_tile)

    out = pl.pallas_call(
        kernel,
        grid=grid,
        in_specs=[
            pl.BlockSpec((pl.Squeezed(), cin, lane_tile), lambda b, r: (b, 0, r)),
            w_spec,
            pl.BlockSpec((c_cols, 1), lambda b, r: (0, 0)),
        ],
        out_specs=pl.BlockSpec((pl.Squeezed(), c_cols, lane_tile),
                               lambda b, r: (b, 0, r)),
        out_shape=jax.ShapeDtypeStruct((n, c_cols, hw_pad), out_dtype),
        compiler_params=pltpu.CompilerParams(
            dimension_semantics=("parallel", "parallel")),
    )(x_flat, w_arg, shift_cols)

    # Un-pad + pixel-shuffle + NCHW in ONE 6-D transpose.
    y = out[:, :, :hw].reshape(n, cout, kh, kw, h, w)
    y = jnp.transpose(y, (0, 1, 4, 2, 5, 3))          # (n, co, i, kh, j, kw)
    return y.reshape(n, cout, h * stride, w * stride)


# --------------------------- pure-JAX reference -----------------------------

def _reference(x_nchw, params, eps=1e-5):
    wt = params["deconv_w"]                     # (Cin, Cout, kh, kw)
    cin, cout, kh, kw = wt.shape
    n, _, h, w = x_nchw.shape
    y = jnp.einsum("ncij,cokl->noikjl", x_nchw, wt).reshape(n, cout, h * kh, w * kw)
    scale = params["bn_gamma"] / jnp.sqrt(params["bn_var"] + eps)
    shift = params["bn_beta"] - params["bn_mean"] * scale
    return jnp.maximum(y * scale[None, :, None, None] + shift[None, :, None, None], 0.0)


# ----------------------------------- main -----------------------------------

if __name__ == "__main__":
    key = jax.random.PRNGKey(0)
    kx, kwgt = jax.random.split(key)

    n, cin, h, w = 2, 4, 16, 16
    cout = 4
    x = jax.random.normal(kx, (n, cin, h, w), jnp.float32)

    params = {
        # PyTorch ConvTranspose2d weight layout: (in_planes, out_planes, kH, kW)
        "deconv_w": jax.random.normal(kwgt, (cin, cout, 2, 2), jnp.float32) * 0.1,
        # BatchNorm2d eval-mode parameters (PyTorch defaults).
        "bn_gamma": jnp.ones((cout,), jnp.float32),
        "bn_beta": jnp.zeros((cout,), jnp.float32),
        "bn_mean": jnp.zeros((cout,), jnp.float32),
        "bn_var": jnp.ones((cout,), jnp.float32),
    }

    out = jax.jit(trans_basic_conv2d_forward)(x, params)
    out = jax.block_until_ready(out)

    assert out.shape == (n, cout, 2 * h, 2 * w), out.shape
    out_f32 = np.asarray(out, dtype=np.float32)
    assert np.all(np.isfinite(out_f32))

    ref = np.asarray(_reference(x, params), dtype=np.float32)
    np.testing.assert_allclose(out_f32, ref, rtol=2e-2, atol=2e-2)

    print("KERNEL_OK")
</pallas_src>

<mosaic_0001>
module attributes {stable_mosaic.version = 11 : i64} {
  func.func @kernel(%arg0: i32, %arg1: i32, %arg2: memref<1x4x256xf32, #tpu.memory_space<vmem>>, %arg3: memref<4x16x1xf32, #tpu.memory_space<vmem>>, %arg4: memref<16x1xf32, #tpu.memory_space<vmem>>, %arg5: memref<1x16x256xbf16, #tpu.memory_space<vmem>>) attributes {dimension_semantics = [#tpu.dimension_semantics<parallel>, #tpu.dimension_semantics<parallel>], iteration_bounds = array<i64: 2, 1>, scalar_prefetch = 0 : i64, scratch_operands = 0 : i64, tpu.core_type = #tpu.core_type<tc>, window_params = [{transform_indices = @transform_0, window_bounds = array<i64: 1, 4, 256>}, {pipeline_mode = #tpu.pipeline_mode<synchronous>, transform_indices = @transform_1, window_bounds = array<i64: 4, 16, 1>}, {pipeline_mode = #tpu.pipeline_mode<synchronous>, transform_indices = @transform_2, window_bounds = array<i64: 16, 1>}, {transform_indices = @transform_3, window_bounds = array<i64: 1, 16, 256>}]} {
    %c0 = arith.constant 0 : index
    %c0_0 = arith.constant 0 : index
    %c0_1 = arith.constant 0 : index
    %0 = vector.load %arg2[%c0, %c0_0, %c0_1] : memref<1x4x256xf32, #tpu.memory_space<vmem>>, vector<1x4x256xf32>
    %1 = vector.shape_cast %0 : vector<1x4x256xf32> to vector<4x256xf32>
    %c0_2 = arith.constant 0 : index
    %c0_3 = arith.constant 0 : index
    %c0_4 = arith.constant 0 : index
    %2 = vector.load %arg3[%c0_2, %c0_3, %c0_4] : memref<4x16x1xf32, #tpu.memory_space<vmem>>, vector<1x16x1xf32>
    %3 = vector.shape_cast %2 : vector<1x16x1xf32> to vector<16x1xf32>
    %4 = vector.extract_strided_slice %1 {offsets = [0, 0], sizes = [1, 256], strides = [1, 1]} : vector<4x256xf32> to vector<1x256xf32>
    %5 = vector.broadcast %3 : vector<16x1xf32> to vector<16x256xf32>
    %6 = vector.broadcast %4 : vector<1x256xf32> to vector<16x256xf32>
    %7 = arith.mulf %5, %6 : vector<16x256xf32>
    %c1 = arith.constant 1 : index
    %c0_5 = arith.constant 0 : index
    %c0_6 = arith.constant 0 : index
    %8 = vector.load %arg3[%c1, %c0_5, %c0_6] : memref<4x16x1xf32, #tpu.memory_space<vmem>>, vector<1x16x1xf32>
    %9 = vector.shape_cast %8 : vector<1x16x1xf32> to vector<16x1xf32>
    %10 = vector.extract_strided_slice %1 {offsets = [1, 0], sizes = [1, 256], strides = [1, 1]} : vector<4x256xf32> to vector<1x256xf32>
    %11 = vector.broadcast %9 : vector<16x1xf32> to vector<16x256xf32>
    %12 = vector.broadcast %10 : vector<1x256xf32> to vector<16x256xf32>
    %13 = arith.mulf %11, %12 : vector<16x256xf32>
    %14 = arith.addf %7, %13 : vector<16x256xf32>
    %c2 = arith.constant 2 : index
    %c0_7 = arith.constant 0 : index
    %c0_8 = arith.constant 0 : index
    %15 = vector.load %arg3[%c2, %c0_7, %c0_8] : memref<4x16x1xf32, #tpu.memory_space<vmem>>, vector<1x16x1xf32>
    %16 = vector.shape_cast %15 : vector<1x16x1xf32> to vector<16x1xf32>
    %17 = vector.extract_strided_slice %1 {offsets = [2, 0], sizes = [1, 256], strides = [1, 1]} : vector<4x256xf32> to vector<1x256xf32>
    %18 = vector.broadcast %16 : vector<16x1xf32> to vector<16x256xf32>
    %19 = vector.broadcast %17 : vector<1x256xf32> to vector<16x256xf32>
    %20 = arith.mulf %18, %19 : vector<16x256xf32>
    %21 = arith.addf %14, %20 : vector<16x256xf32>
    %c3 = arith.constant 3 : index
    %c0_9 = arith.constant 0 : index
    %c0_10 = arith.constant 0 : index
    %22 = vector.load %arg3[%c3, %c0_9, %c0_10] : memref<4x16x1xf32, #tpu.memory_space<vmem>>, vector<1x16x1xf32>
    %23 = vector.shape_cast %22 : vector<1x16x1xf32> to vector<16x1xf32>
    %24 = vector.extract_strided_slice %1 {offsets = [3, 0], sizes = [1, 256], strides = [1, 1]} : vector<4x256xf32> to vector<1x256xf32>
    %25 = vector.broadcast %23 : vector<16x1xf32> to vector<16x256xf32>
    %26 = vector.broadcast %24 : vector<1x256xf32> to vector<16x256xf32>
    %27 = arith.mulf %25, %26 : vector<16x256xf32>
    %28 = arith.addf %21, %27 : vector<16x256xf32>
    %c0_11 = arith.constant 0 : index
    %c0_12 = arith.constant 0 : index
    %29 = vector.load %arg4[%c0_11, %c0_12] : memref<16x1xf32, #tpu.memory_space<vmem>>, vector<16x1xf32>
    %30 = vector.broadcast %29 : vector<16x1xf32> to vector<16x256xf32>
    %31 = arith.addf %28, %30 : vector<16x256xf32>
    %cst = arith.constant 0.000000e+00 : f32
    %32 = vector.broadcast %cst : f32 to vector<16x256xf32>
    %33 = arith.maximumf %31, %32 : vector<16x256xf32>
    %34 = arith.truncf %33 : vector<16x256xf32> to vector<16x256xbf16>
    %c0_13 = arith.constant 0 : index
    %c0_14 = arith.constant 0 : index
    %c0_15 = arith.constant 0 : index
    %35 = vector.load %arg5[%c0_13, %c0_14, %c0_15] : memref<1x16x256xbf16, #tpu.memory_space<vmem>>, vector<1x16x256xbf16>
    %36 = vector.shape_cast %35 : vector<1x16x256xbf16> to vector<16x256xbf16>
    %37 = vector.shape_cast %34 : vector<16x256xbf16> to vector<1x16x256xbf16>
    tpu.vector_store %arg5[%c0_13, %c0_14, %c0_15], %37 {strides = array<i32>} : memref<1x16x256xbf16, #tpu.memory_space<vmem>>, vector<1x16x256xbf16>,
    return
  }
  func.func @transform_0(%arg0: i32, %arg1: i32) -> (i32, i32, i32) {
    %c0_i32 = arith.constant 0 : i32
    %c0_i32_0 = arith.constant 0 : i32
    return %arg0, %c0_i32, %arg1 : i32, i32, i32
  }
  func.func @transform_1(%arg0: i32, %arg1: i32) -> (i32, i32, i32) {
    %c0_i32 = arith.constant 0 : i32
    %c0_i32_0 = arith.constant 0 : i32
    %c0_i32_1 = arith.constant 0 : i32
    %c0_i32_2 = arith.constant 0 : i32
    return %c0_i32, %c0_i32_0, %c0_i32_1 : i32, i32, i32
  }
  func.func @transform_2(%arg0: i32, %arg1: i32) -> (i32, i32) {
    %c0_i32 = arith.constant 0 : i32
    %c0_i32_0 = arith.constant 0 : i32
    %c0_i32_1 = arith.constant 0 : i32
    return %c0_i32, %c0_i32_0 : i32, i32
  }
  func.func @transform_3(%arg0: i32, %arg1: i32) -> (i32, i32, i32) {
    %c0_i32 = arith.constant 0 : i32
    %c0_i32_0 = arith.constant 0 : i32
    return %arg0, %c0_i32, %arg1 : i32, i32, i32
  }
}

</mosaic_0001>

<llo_original>
// kernel: trans_basic_conv2d_forward.1
$region0: #{trans_basic_conv2d_forward.1}
  #allocation0 [shape = 'u32[]', space=smem, size = 0x4, offset = 0x4, fixed_abs, tag = 'smem constant byte address 0x4 - core index']
  #allocation1 [shape = 'u32[144,128]{1,0:T(1,128)}', space=vmem, size = 0x12000, scoped, tag = 'internal scratch']
  %s0 = inlined_call_operand.vmem [shape: f32[2,4,256], index: 0, kind: input, shape index: {}]
  %s1 = inlined_call_operand.vmem [shape: f32[4,16,1], index: 1, kind: input, shape index: {}]
  %s2 = inlined_call_operand.vmem [shape: f32[16,1], index: 2, kind: input, shape index: {}]
  %s3 = inlined_call_operand.vmem [shape: bf16[2,16,256], index: 3, kind: output, shape index: {}]
  %s4 = sld [smem:[#allocation0]]
  $region45: #{trans_basic_conv2d_forward.1} parent=0
    _
  %s6 = ssub.s32 1, %s4
  %s7 = scalar_select 0, %s6, %s4
  loop: start=0, step=1, limit=4
  $region2: #{trans_basic_conv2d_forward.1} parent=0 // loop_pre_header
    _
  $region3: #{trans_basic_conv2d_forward.1} parent=0 // loop_header
    %s9 = sphi 0, %s13
    %p10 = scmp.ge.s32.totalorder %s9, 4
    %s16 = sphi 0, %s28
    %s17 = sphi 0, %s24
    %s18 = sphi 0, %s16
    %s19 = sphi 0, %s17
    %s20 = sphi 0, %s18
    %s21 = sphi 0, %s19
    %s33 = sphi 0, %s35
    %s36 = sphi 0, %s33
    %s37 = sphi 0, %s36
    %s53 = sphi 0, %s37
    %s57 = sphi 0, %s57
    %s59 = sphi 0, %s57
    %s60 = sphi 0, %s59
    %s74 = sphi 0, %s60
    %s78 = sphi 0, %s78
    %s80 = sphi 0, %s78
    %s81 = sphi 0, %s80
    %s95 = sphi 0, %s81
    %s103 = sphi 0, %s105
    %s106 = sphi 0, %s103
    %s107 = sphi 0, %s106
    %s123 = sphi 0, %s107
  $region4: #{trans_basic_conv2d_forward.1} parent=0 // loop_header_branch
    %12 = sbr.rel (%p10) target = $region8
  $region5: #{trans_basic_conv2d_forward.1} parent=0 // loop_body
    %s14 = ssub.s32 %s9, 1
    %s15 = ssub.s32 %s9, 2
    %s22 = sadd.s32 1, %s17
    %p23 = scmp.ge.s32.totalorder %s22, 1
    %s24 = scalar_select %p23, 0, %s22
    %s25 = sadd.s32 1, %s16
    %s26 = scalar_select %p23, %s25, %s16
    %p27 = scmp.ge.s32.totalorder %s26, 2
    %s28 = scalar_select %p27, 0, %s26
    %s29 = ssub.s32 %s16, %s28
    %s30 = ssub.s32 %s17, %s24
    %s31 = sor.u32 %s29, %s30
    %p32 = scmp.eq.s32.totalorder %s31, 0
    %s34 = sadd.s32 %s33, 1
    %s35 = scalar_select %p32, %s33, %s34
    %p38 = pneg %p32
    %p39 = scmp.eq.s32.totalorder %s9, 1
    %p40 = por %p38, %p39
    %p41 = scmp.ne.s32.totalorder %s33, %s36
    %p42 = scmp.eq.s32.totalorder %s9, 0
    %p43 = por %p41, %p42
    %p44 = scmp.ne.s32.totalorder %s33, %s36
    %p45 = scmp.eq.s32.totalorder %s14, 1
    %p46 = por %p44, %p45
    %p47 = scmp.ne.s32.totalorder %s36, %s37
    %p48 = scmp.eq.s32.totalorder %s14, 0
    %p49 = por %p47, %p48
    %p50 = scmp.ne.s32.totalorder %s36, %s37
    %p51 = scmp.eq.s32.totalorder %s15, 1
    %p52 = por %p50, %p51
    %p54 = scmp.ne.s32.totalorder %s37, %s53
    %p55 = scmp.eq.s32.totalorder %s15, 0
    %p56 = por %p54, %p55
    %s58 = sadd.s32 %s57, 1
    %p61 = scmp.eq.s32.totalorder %s9, 1
    %p62 = scmp.ne.s32.totalorder %s57, %s59
    %p63 = scmp.eq.s32.totalorder %s9, 0
    %p64 = por %p62, %p63
    %p65 = scmp.ne.s32.totalorder %s57, %s59
    %p66 = scmp.eq.s32.totalorder %s14, 1
    %p67 = por %p65, %p66
    %p68 = scmp.ne.s32.totalorder %s59, %s60
    %p69 = scmp.eq.s32.totalorder %s14, 0
    %p70 = por %p68, %p69
    %p71 = scmp.ne.s32.totalorder %s59, %s60
    %p72 = scmp.eq.s32.totalorder %s15, 1
    %p73 = por %p71, %p72
    %p75 = scmp.ne.s32.totalorder %s60, %s74
    %p76 = scmp.eq.s32.totalorder %s15, 0
    %p77 = por %p75, %p76
    %s79 = sadd.s32 %s78, 1
    %p82 = scmp.eq.s32.totalorder %s9, 1
    %p83 = scmp.ne.s32.totalorder %s78, %s80
    %p84 = scmp.eq.s32.totalorder %s9, 0
    %p85 = por %p83, %p84
    %p86 = scmp.ne.s32.totalorder %s78, %s80
    %p87 = scmp.eq.s32.totalorder %s14, 1
    %p88 = por %p86, %p87
    %p89 = scmp.ne.s32.totalorder %s80, %s81
    %p90 = scmp.eq.s32.totalorder %s14, 0
    %p91 = por %p89, %p90
    %p92 = scmp.ne.s32.totalorder %s80, %s81
    %p93 = scmp.eq.s32.totalorder %s15, 1
    %p94 = por %p92, %p93
    %p96 = scmp.ne.s32.totalorder %s81, %s95
    %p97 = scmp.eq.s32.totalorder %s15, 0
    %p98 = por %p96, %p97
    %s99 = ssub.s32 %s16, %s28
    %s100 = ssub.s32 %s17, %s24
    %s101 = sor.u32 %s99, %s100
    %p102 = scmp.eq.s32.totalorder %s101, 0
    %s104 = sadd.s32 %s103, 1
    %s105 = scalar_select %p102, %s103, %s104
    %p108 = pneg %p102
    %p109 = scmp.eq.s32.totalorder %s9, 1
    %p110 = por %p108, %p109
    %p111 = scmp.ne.s32.totalorder %s103, %s106
    %p112 = scmp.eq.s32.totalorder %s9, 0
    %p113 = por %p111, %p112
    %p114 = scmp.ne.s32.totalorder %s103, %s106
    %p115 = scmp.eq.s32.totalorder %s14, 1
    %p116 = por %p114, %p115
    %p117 = scmp.ne.s32.totalorder %s106, %s107
    %p118 = scmp.eq.s32.totalorder %s14, 0
    %p119 = por %p117, %p118
    %p120 = scmp.ne.s32.totalorder %s106, %s107
    %p121 = scmp.eq.s32.totalorder %s15, 1
    %p122 = por %p120, %p121
    %p124 = scmp.ne.s32.totalorder %s107, %s123
    %p125 = scmp.eq.s32.totalorder %s15, 0
    %p126 = por %p124, %p125
    %p127 = scmp.le.s32.totalorder 1, %s9
    %p128 = scmp.lt.s32.totalorder %s9, 3
    %p129 = pnand %p127, %p128
    %p130 = pneg %p129
    // Predicated region
    $region9: #{trans_basic_conv2d_forward.1} parent=5 // pred_check
      _
    $region10: #{trans_basic_conv2d_forward.1} parent=5 // pred_check_branch
      %132 = sbr.rel (%p129) target = $region12
    $region11: #{trans_basic_conv2d_forward.1} parent=5 // pred_region
      %s133 = ssub.s32 %s9, 1
      // Predicated region
      $region13: #{trans_basic_conv2d_forward.1} parent=11 // pred_check
        %p134 = pneg %p70
      $region14: #{trans_basic_conv2d_forward.1} parent=11 // pred_check_branch
        %136 = sbr.rel (%p134) target = $region16
      $region15: #{trans_basic_conv2d_forward.1} parent=11 // pred_region
        _
      $region16: #{trans_basic_conv2d_forward.1} parent=11 // pred_fallthru
        _
      // Predicated region
      $region17: #{trans_basic_conv2d_forward.1} parent=11 // pred_check
        %p137 = pneg %p91
      $region18: #{trans_basic_conv2d_forward.1} parent=11 // pred_check_branch
        %139 = sbr.rel (%p137) target = $region20
      $region19: #{trans_basic_conv2d_forward.1} parent=11 // pred_region
        _
      $region20: #{trans_basic_conv2d_forward.1} parent=11 // pred_fallthru
        _
    $region12: #{trans_basic_conv2d_forward.1} parent=5 // pred_fallthru
      _
    %p140 = scmp.lt.s32.totalorder %s9, 2
    // Predicated region
    $region21: #{trans_basic_conv2d_forward.1} parent=5 // pred_check
      %p141 = pneg %p140
    $region22: #{trans_basic_conv2d_forward.1} parent=5 // pred_check_branch
      %143 = sbr.rel (%p141) target = $region24
    $region23: #{trans_basic_conv2d_forward.1} parent=5 // pred_region
      // Predicated region
      $region25: #{trans_basic_conv2d_forward.1} parent=23 // pred_check
        %p144 = pneg %p43
      $region26: #{trans_basic_conv2d_forward.1} parent=23 // pred_check_branch
        %146 = sbr.rel (%p144) target = $region28
      $region27: #{trans_basic_conv2d_forward.1} parent=23 // pred_region
        %s147 = smul.u32 2, %s17
        %p148 = scmp.lt.s32.totalorder %s16, 1
        %s149 = scalar_select %p148, %s16, 1
        %p150 = scmp.lt.s32.totalorder %s147, 1
        %s151 = scalar_select %p150, %s147, 1
        %s152 = smul.addr %s149, 2
        %s153 = sadd.s32 %s151, %s152
        %s154 = smul.addr %s153, 4
        %s155 = scalar_lea.vmem %s0, %s154
        %s156 = smul.u32 2, %s17
      $region28: #{trans_basic_conv2d_forward.1} parent=23 // pred_fallthru
        _
    $region24: #{trans_basic_conv2d_forward.1} parent=5 // pred_fallthru
      _
    %p157 = scmp.le.s32.totalorder 1, %s9
    %p158 = scmp.lt.s32.totalorder %s9, 3
    %p159 = pnand %p157, %p158
    %p160 = pneg %p159
    // Predicated region
    $region29: #{trans_basic_conv2d_forward.1} parent=5 // pred_check
      _
    $region30: #{trans_basic_conv2d_forward.1} parent=5 // pred_check_branch
      %162 = sbr.rel (%p159) target = $region32
    $region31: #{trans_basic_conv2d_forward.1} parent=5 // pred_region
      %s163 = ssub.s32 %s9, 1
      %s164 = smul.u32 2, %s19
      %p165 = scmp.lt.s32.totalorder %s18, 1
      %s166 = scalar_select %p165, %s18, 1
      %p167 = scmp.lt.s32.totalorder %s164, 1
      %s168 = scalar_select %p167, %s164, 1
      %s169 = smul.addr %s166, 2
      %s170 = sadd.s32 %s168, %s169
      %s171 = smul.addr %s170, 4
      %s172 = scalar_lea.vmem %s0, %s171
      %p173 = pneg %p49
      %p174 = pneg %p46
      %p175 = pneg %p70
      %p176 = pneg %p67
      %p177 = pneg %p91
      %p178 = pneg %p88
      %p179 = pneg %p119
      %p180 = pneg %p116
      %s181 = smul.u32 2, %s19
      %p182 = scmp.lt.s32.totalorder %s18, 1
      %s183 = scalar_select %p182, %s18, 1
      %p184 = scmp.lt.s32.totalorder %s181, 1
      %s185 = scalar_select %p184, %s181, 1
      %s186 = smul.addr %s183, 4
      %s187 = sadd.s32 %s185, %s186
      %s188 = smul.addr %s187, 4
      %s189 = scalar_lea.vmem %s3, %s188
      %s190 = smul.u32 2, %s19
      %p191 = scmp.lt.s32.totalorder %s18, 1
      %s192 = scalar_select %p191, %s18, 1
      %p193 = scmp.lt.s32.totalorder %s190, 1
      %s194 = scalar_select %p193, %s190, 1
      %s195 = smul.addr %s192, 2
      %s196 = sadd.s32 %s194, %s195
      %s197 = smul.addr %s196, 4
      %s198 = scalar_lea.vmem %s0, %s197
      %s199 = smul.u32 2, %s19
      %s200 = smul.u32 2, %s19
      %p201 = scmp.lt.s32.totalorder %s18, 1
      %s202 = scalar_select %p201, %s18, 1
      %p203 = scmp.lt.s32.totalorder %s200, 1
      %s204 = scalar_select %p203, %s200, 1
      %s205 = smul.addr %s202, 4
      %s206 = sadd.s32 %s204, %s205
      %s207 = smul.addr %s206, 4
      %s208 = scalar_lea.vmem %s3, %s207
      %s209 = smul.u32 2, %s19
      %v210 = vld [vmem:[%s198] sm:$0xff]
      %v211 = vld [vmem:[%s1] sm:$0xff]
      %v212 = vld [vmem:[%s1 + $0x8] sm:$0xff]
      %214 = vset.pattern.permute.xlu0 0
      %215 = vperm.xlu0 %214, %v211
      %v216 = vpop.permute.xlu0 %215
      %219 = vset.pattern.permute.xlu0 0
      %220 = vperm.xlu0 %219, %v212
      %v221 = vpop.permute.xlu0 %220
      %v224 = vlaneseq
      %v225 = vshrl.u32 %v224, 7
      %v226 = vsub.s32 0, %v225
      %v227 = vrot.slane %v210, %v226
      %v228 = vlaneseq
      %v229 = vshrl.u32 %v228, 7
      %v230 = vsub.s32 4, %v229
      %v231 = vrot.slane %v210, %v230
      %v234 = vlaneseq
      %v235 = vshrl.u32 %v234, 7
      %v236 = vsub.s32 0, %v235
      %v237 = vrot.slane %v227, %v236
      %v238 = vlaneseq
      %v239 = vshrl.u32 %v238, 7
      %v240 = vsub.s32 0, %v239
      %v241 = vrot.slane %v231, %v240
      %v242 = vmul.f32 %v216, %v237
      %v243 = vmul.f32 %v216, %v241
      %v244 = vmul.f32 %v221, %v237
      %v245 = vmul.f32 %v221, %v241
      %s246 = scalar_lea.vmem %s1, 16
      %v247 = vld [vmem:[%s246] sm:$0xff]
      %v248 = vld [vmem:[%s246 + $0x8] sm:$0xff]
      %250 = vset.pattern.permute.xlu0 0
      %251 = vperm.xlu0 %250, %v247
      %v252 = vpop.permute.xlu0 %251
      %255 = vset.pattern.permute.xlu0 0
      %256 = vperm.xlu0 %255, %v248
      %v257 = vpop.permute.xlu0 %256
      %v259 = vlaneseq
      %v260 = vshrl.u32 %v259, 7
      %v261 = vsub.s32 1, %v260
      %v262 = vrot.slane %v210, %v261
      %v263 = vlaneseq
      %v264 = vshrl.u32 %v263, 7
      %v265 = vsub.s32 5, %v264
      %v266 = vrot.slane %v210, %v265
      %v269 = vlaneseq
      %v270 = vshrl.u32 %v269, 7
      %v271 = vsub.s32 1, %v270
      %v272 = vrot.slane %v262, %v271
      %v273 = vlaneseq
      %v274 = vshrl.u32 %v273, 7
      %v275 = vsub.s32 1, %v274
      %v276 = vrot.slane %v266, %v275
      %v277 = vmul.f32 %v252, %v272
      %v278 = vmul.f32 %v252, %v276
      %v279 = vmul.f32 %v257, %v272
      %v280 = vmul.f32 %v257, %v276
      %v281 = vadd.f32 %v242, %v277
      %v282 = vadd.f32 %v243, %v278
      %v283 = vadd.f32 %v244, %v279
      %v284 = vadd.f32 %v245, %v280
      %s285 = scalar_lea.vmem %s1, 32
      %v286 = vld [vmem:[%s285] sm:$0xff]
      %v287 = vld [vmem:[%s285 + $0x8] sm:$0xff]
      %289 = vset.pattern.permute.xlu0 0
      %290 = vperm.xlu0 %289, %v286
      %v291 = vpop.permute.xlu0 %290
      %294 = vset.pattern.permute.xlu0 0
      %295 = vperm.xlu0 %294, %v287
      %v296 = vpop.permute.xlu0 %295
      %v298 = vlaneseq
      %v299 = vshrl.u32 %v298, 7
      %v300 = vsub.s32 2, %v299
      %v301 = vrot.slane %v210, %v300
      %v302 = vlaneseq
      %v303 = vshrl.u32 %v302, 7
      %v304 = vsub.s32 6, %v303
      %v305 = vrot.slane %v210, %v304
      %v308 = vlaneseq
      %v309 = vshrl.u32 %v308, 7
      %v310 = vsub.s32 2, %v309
      %v311 = vrot.slane %v301, %v310
      %v312 = vlaneseq
      %v313 = vshrl.u32 %v312, 7
      %v314 = vsub.s32 2, %v313
      %v315 = vrot.slane %v305, %v314
      %v316 = vmul.f32 %v291, %v311
      %v317 = vmul.f32 %v291, %v315
      %v318 = vmul.f32 %v296, %v311
      %v319 = vmul.f32 %v296, %v315
      %v320 = vadd.f32 %v281, %v316
      %v321 = vadd.f32 %v282, %v317
      %v322 = vadd.f32 %v283, %v318
      %v323 = vadd.f32 %v284, %v319
      %s324 = scalar_lea.vmem %s1, 48
      %v325 = vld [vmem:[%s324] sm:$0xff]
      %v326 = vld [vmem:[%s324 + $0x8] sm:$0xff]
      %328 = vset.pattern.permute.xlu0 0
      %329 = vperm.xlu0 %328, %v325
      %v330 = vpop.permute.xlu0 %329
      %333 = vset.pattern.permute.xlu0 0
      %334 = vperm.xlu0 %333, %v326
      %v335 = vpop.permute.xlu0 %334
      %v337 = vlaneseq
      %v338 = vshrl.u32 %v337, 7
      %v339 = vsub.s32 3, %v338
      %v340 = vrot.slane %v210, %v339
      %v341 = vlaneseq
      %v342 = vshrl.u32 %v341, 7
      %v343 = vsub.s32 7, %v342
      %v344 = vrot.slane %v210, %v343
      %v347 = vlaneseq
      %v348 = vshrl.u32 %v347, 7
      %v349 = vsub.s32 3, %v348
      %v350 = vrot.slane %v340, %v349
      %v351 = vlaneseq
      %v352 = vshrl.u32 %v351, 7
      %v353 = vsub.s32 3, %v352
      %v354 = vrot.slane %v344, %v353
      %v355 = vmul.f32 %v330, %v350
      %v356 = vmul.f32 %v330, %v354
      %v357 = vmul.f32 %v335, %v350
      %v358 = vmul.f32 %v335, %v354
      %v359 = vadd.f32 %v320, %v355
      %v360 = vadd.f32 %v321, %v356
      %v361 = vadd.f32 %v322, %v357
      %v362 = vadd.f32 %v323, %v358
      %v363 = vld [vmem:[%s2] sm:$0xff]
      %v364 = vld [vmem:[%s2 + $0x8] sm:$0xff]
      %366 = vset.pattern.permute.xlu0 0
      %367 = vperm.xlu0 %366, %v363
      %v368 = vpop.permute.xlu0 %367
      %371 = vset.pattern.permute.xlu0 0
      %372 = vperm.xlu0 %371, %v364
      %v373 = vpop.permute.xlu0 %372
      %v375 = vadd.f32 %v359, %v368
      %v376 = vadd.f32 %v360, %v368
      %v377 = vadd.f32 %v361, %v373
      %v378 = vadd.f32 %v362, %v373
      %v379 = vmax.f32 %v375, 0.0
      %v380 = vmax.f32 %v376, 0.0
      %v381 = vmax.f32 %v377, 0.0
      %v382 = vmax.f32 %v378, 0.0
      %v383 = vpack.c.bf16 %v381, %v379
      %v384 = vpack.c.bf16 %v382, %v380
      %v387 = vunpack.c.l.b16 %v383
      %v388 = vunpack.c.l.b16 %v384
      %v389 = vunpack.c.h.b16 %v383
      %v390 = vunpack.c.h.b16 %v384
      %v391 = vpack.c.b16 %v388, %v387
      %v392 = vpack.c.b16 %v390, %v389
      %395 = vst [vmem:[%s208] sm:$0xff] %v391
      %396 = vst [vmem:[%s208 + $0x8] sm:$0xff] %v392
      %s397 = smul.u32 2, %s19
      %p398 = scmp.lt.s32.totalorder %s18, 1
      %s399 = scalar_select %p398, %s18, 1
      %p400 = scmp.lt.s32.totalorder %s397, 1
      %s401 = scalar_select %p400, %s397, 1
      %s402 = smul.addr %s399, 4
      %s403 = sadd.s32 %s401, %s402
      %s404 = smul.addr %s403, 4
      %s405 = scalar_lea.vmem %s3, %s404
      // Predicated region
      $region33: #{trans_basic_conv2d_forward.1} parent=31 // pred_check
        %p406 = pneg %p116
      $region34: #{trans_basic_conv2d_forward.1} parent=31 // pred_check_branch
        %408 = sbr.rel (%p406) target = $region36
      $region35: #{trans_basic_conv2d_forward.1} parent=31 // pred_region
        %s409 = smul.u32 2, %s19
      $region36: #{trans_basic_conv2d_forward.1} parent=31 // pred_fallthru
        _
    $region32: #{trans_basic_conv2d_forward.1} parent=5 // pred_fallthru
      _
    %p410 = scmp.le.s32.totalorder 2, %s9
    // Predicated region
    $region37: #{trans_basic_conv2d_forward.1} parent=5 // pred_check
      %p411 = pneg %p410
    $region38: #{trans_basic_conv2d_forward.1} parent=5 // pred_check_branch
      %413 = sbr.rel (%p411) target = $region40
    $region39: #{trans_basic_conv2d_forward.1} parent=5 // pred_region
      %s414 = ssub.s32 %s9, 2
      // Predicated region
      $region41: #{trans_basic_conv2d_forward.1} parent=39 // pred_check
        %p415 = pneg %p122
      $region42: #{trans_basic_conv2d_forward.1} parent=39 // pred_check_branch
        %417 = sbr.rel (%p415) target = $region44
      $region43: #{trans_basic_conv2d_forward.1} parent=39 // pred_region
        %s418 = smul.u32 2, %s21
        %p419 = scmp.lt.s32.totalorder %s20, 1
        %s420 = scalar_select %p419, %s20, 1
        %p421 = scmp.lt.s32.totalorder %s418, 1
        %s422 = scalar_select %p421, %s418, 1
        %s423 = smul.addr %s420, 4
        %s424 = sadd.s32 %s422, %s423
        %s425 = smul.addr %s424, 4
        %s426 = scalar_lea.vmem %s3, %s425
      $region44: #{trans_basic_conv2d_forward.1} parent=39 // pred_fallthru
        _
    $region40: #{trans_basic_conv2d_forward.1} parent=5 // pred_fallthru
      _
  $region6: #{trans_basic_conv2d_forward.1} parent=0 // loop_footer
    %s13 = sadd.s32 1, %s9
  $region7: #{trans_basic_conv2d_forward.1} parent=0 // loop_footer_branch
    %8 = sbr.rel target = $region3
  $region8: #{trans_basic_conv2d_forward.1} parent=0 // loop_exit
    _

</llo_original>
